<compile_context>
chip_gen: v6e
topology: v6e:2x2x1
jax: 0.10.0
libtpu: 0.0.40
codegen_flags: <defaults>
</compile_context>

<pallas_src>
import functools

import jax
import jax.numpy as jnp
from jax.experimental import pallas as pl
from jax.experimental.pallas import tpu as pltpu


def _round_up(x, m):
    return ((x + m - 1) // m) * m


def _mlp_kernel(*refs, n_layers, slope):
    """refs = (z, w0, b0, w1, b1, ..., w_{L-1}, b_{L-1}, out); all VMEM blocks.

    z / w_i are bf16 (compute dtype); biases f32; MXU accumulation in f32.
    """
    x = refs[0][...]
    for i in range(n_layers):
        w_ref = refs[1 + 2 * i]
        b_ref = refs[2 + 2 * i]                      # (1, N) -> broadcasts over rows
        y = jnp.dot(x, w_ref[...], preferred_element_type=jnp.float32) + b_ref[...]
        if i < n_layers - 1:
            y = jnp.where(y > 0.0, y, slope * y)     # LeakyReLU on the f32 accumulator
            x = y.astype(w_ref.dtype)                # bf16 again for the next MXU pass
        else:
            x = y
    o_ref = refs[1 + 2 * n_layers]
    o_ref[...] = x.astype(o_ref.dtype)


def make_generator_forward(params, *, slope=0.2, param_dtype=jnp.bfloat16,
                           tile_m=256, lane=128):
    """Pads/casts the Generator parameters ONCE and returns a jitted fused forward(z)."""
    n_layers = len(params)
    dims = [params[0][0].shape[0]] + [w.shape[1] for (w, _) in params]
    pdims = [_round_up(d, lane) for d in dims]
    out_dim = dims[-1]

    # One-time lane padding / dtype cast (weights -> bf16, biases stay f32).
    flat_wb = []
    for i, (w, b) in enumerate(params):
        in_d, out_d = w.shape
        w_p = jnp.pad(w, ((0, pdims[i] - in_d), (0, pdims[i + 1] - out_d)))
        b_p = jnp.pad(jnp.reshape(b, (1, -1)), ((0, 0), (0, pdims[i + 1] - out_d)))
        flat_wb.append(w_p.astype(param_dtype))
        flat_wb.append(b_p.astype(jnp.float32))
    flat_wb = tuple(flat_wb)

    kernel = functools.partial(_mlp_kernel, n_layers=n_layers, slope=slope)

    # VMEM budget: double-buffered weights/biases + 2x activation-in / output tiles.
    p_itemsize = jnp.dtype(param_dtype).itemsize
    w_bytes = sum(pdims[i] * pdims[i + 1] for i in range(n_layers)) * p_itemsize * 2
    b_bytes = sum(8 * pdims[i + 1] for i in range(n_layers)) * 4 * 2
    act_bytes = 2 * tile_m * pdims[0] * p_itemsize + 2 * tile_m * pdims[-1] * 4
    scratch_bytes = 4 * tile_m * max(pdims) * 4
    vmem_limit = int(min(64 * 1024 * 1024,
                         w_bytes + b_bytes + act_bytes + scratch_bytes + (4 << 20)))

    @jax.jit
    def forward(z):
        batch = z.shape[0]
        num_tiles = pl.cdiv(batch, tile_m)
        if num_tiles > 1:
            # v7x has 2 TensorCores sharing the "parallel" grid axis -> even tile count.
            num_tiles = _round_up(num_tiles, 2)
        padded_batch = num_tiles * tile_m

        z_p = jnp.pad(z, ((0, padded_batch - batch), (0, pdims[0] - dims[0])))
        z_p = z_p.astype(param_dtype)

        # Activations tiled over the batch grid axis; weights/biases are full blocks
        # with a constant block index -> fetched once and resident in VMEM.
        in_specs = [pl.BlockSpec((tile_m, pdims[0]), lambda m: (m, 0))]
        for i in range(n_layers):
            in_specs.append(pl.BlockSpec((pdims[i], pdims[i + 1]), lambda m: (0, 0)))
            in_specs.append(pl.BlockSpec((1, pdims[i + 1]), lambda m: (0, 0)))
        out_spec = pl.BlockSpec((tile_m, pdims[-1]), lambda m: (m, 0))

        out_p = pl.pallas_call(
            kernel,
            out_shape=jax.ShapeDtypeStruct((padded_batch, pdims[-1]), jnp.float32),
            grid_spec=pl.GridSpec(
                grid=(num_tiles,),
                in_specs=in_specs,
                out_specs=out_spec,
            ),
            compiler_params=pltpu.CompilerParams(
                dimension_semantics=("parallel",),
                vmem_limit_bytes=vmem_limit,
            ),
        )(z_p, *flat_wb)

        # Slice off batch / lane padding.
        return out_p[:batch, :out_dim].astype(z.dtype)

    return forward


def init_generator_params(key, latent_dim, output_dim, layers, dtype=jnp.float32):
    """Same shapes/init style as PyTorch nn.Linear; weights stored (in, out)."""
    dims = [latent_dim] + list(layers) + [output_dim]
    params = []
    for i in range(len(dims) - 1):
        key, kw, kb = jax.random.split(key, 3)
        in_d, out_d = dims[i], dims[i + 1]
        bound = 1.0 / jnp.sqrt(in_d)
        w = jax.random.uniform(kw, (in_d, out_d), dtype, -bound, bound)
        b = jax.random.uniform(kb, (1, out_d), dtype, -bound, bound)
        params.append((w, b))
    return params


def generator_forward_ref(z, params, slope=0.2):
    """Pure-JAX f32 reference (PyTorch semantics) for correctness check."""
    x = z
    n = len(params)
    for i, (w, b) in enumerate(params):
        x = x @ w + b
        if i < n - 1:
            x = jnp.where(x > 0.0, x, slope * x)
    return x


if __name__ == "__main__":
    latent_dim = 32
    output_dim = 16
    layers = (64, 64)
    batch = 8

    key = jax.random.PRNGKey(0)
    kz, kp, kz2 = jax.random.split(key, 3)
    z = jax.random.normal(kz, (batch, latent_dim), jnp.float32)
    params = init_generator_params(kp, latent_dim, output_dim, layers)

    fwd = make_generator_forward(params)   # pads/casts weights once

    # Small-batch case (single 256-row tile, grid=(1,)).
    out = jax.block_until_ready(fwd(z))
    ref = generator_forward_ref(z, params)
    assert out.shape == (batch, output_dim)
    # bf16 operands with f32 accumulation -> small drift vs. the f32 reference.
    assert jnp.allclose(out, ref, atol=5e-2, rtol=5e-2)

    # Larger batch exercises the multi-tile (even tile count), TC-parallel grid path.
    z_big = jax.random.normal(kz2, (300, latent_dim), jnp.float32)
    out_big = jax.block_until_ready(fwd(z_big))
    ref_big = generator_forward_ref(z_big, params)
    assert out_big.shape == (300, output_dim)
    assert jnp.allclose(out_big, ref_big, atol=5e-2, rtol=5e-2)

    print("KERNEL_OK")
</pallas_src>

<mosaic_0001>
module attributes {stable_mosaic.version = 11 : i64} {
  func.func @_mlp_kernel(%arg0: i32, %arg1: memref<256x128xbf16, #tpu.memory_space<vmem>>, %arg2: memref<128x128xbf16, #tpu.memory_space<vmem>>, %arg3: memref<1x128xf32, #tpu.memory_space<vmem>>, %arg4: memref<128x128xbf16, #tpu.memory_space<vmem>>, %arg5: memref<1x128xf32, #tpu.memory_space<vmem>>, %arg6: memref<128x128xbf16, #tpu.memory_space<vmem>>, %arg7: memref<1x128xf32, #tpu.memory_space<vmem>>, %arg8: memref<256x128xf32, #tpu.memory_space<vmem>>) attributes {dimension_semantics = [#tpu.dimension_semantics<parallel>], iteration_bounds = array<i64: 1>, scalar_prefetch = 0 : i64, scratch_operands = 0 : i64, tpu.core_type = #tpu.core_type<tc>, window_params = [{transform_indices = @transform_0, window_bounds = array<i64: 256, 128>}, {pipeline_mode = #tpu.pipeline_mode<synchronous>, transform_indices = @transform_1, window_bounds = array<i64: 128, 128>}, {pipeline_mode = #tpu.pipeline_mode<synchronous>, transform_indices = @transform_2, window_bounds = array<i64: 1, 128>}, {pipeline_mode = #tpu.pipeline_mode<synchronous>, transform_indices = @transform_3, window_bounds = array<i64: 128, 128>}, {pipeline_mode = #tpu.pipeline_mode<synchronous>, transform_indices = @transform_4, window_bounds = array<i64: 1, 128>}, {pipeline_mode = #tpu.pipeline_mode<synchronous>, transform_indices = @transform_5, window_bounds = array<i64: 128, 128>}, {pipeline_mode = #tpu.pipeline_mode<synchronous>, transform_indices = @transform_6, window_bounds = array<i64: 1, 128>}, {transform_indices = @transform_7, window_bounds = array<i64: 256, 128>}]} {
    %c0 = arith.constant 0 : index
    %c0_0 = arith.constant 0 : index
    %0 = vector.load %arg1[%c0, %c0_0] : memref<256x128xbf16, #tpu.memory_space<vmem>>, vector<256x128xbf16>
    %c0_1 = arith.constant 0 : index
    %c0_2 = arith.constant 0 : index
    %1 = vector.load %arg2[%c0_1, %c0_2] : memref<128x128xbf16, #tpu.memory_space<vmem>>, vector<128x128xbf16>
    %cst = arith.constant dense<0.000000e+00> : vector<256x128xf32>
    %2 = tpu.matmul %0, %1, %cst {dimension_numbers = #tpu.dot_dimension_numbers<[1], [0], [0], [1], [0, 0, 1, 1], [], []>} : vector<256x128xbf16>, vector<128x128xbf16>, vector<256x128xf32> -> vector<256x128xf32>
    %c0_3 = arith.constant 0 : index
    %c0_4 = arith.constant 0 : index
    %3 = vector.load %arg3[%c0_3, %c0_4] : memref<1x128xf32, #tpu.memory_space<vmem>>, vector<1x128xf32>
    %4 = vector.broadcast %3 : vector<1x128xf32> to vector<256x128xf32>
    %5 = arith.addf %2, %4 : vector<256x128xf32>
    %cst_5 = arith.constant 0.000000e+00 : f32
    %6 = vector.broadcast %cst_5 : f32 to vector<256x128xf32>
    %7 = arith.cmpf ogt, %5, %6 : vector<256x128xf32>
    %cst_6 = arith.constant 2.000000e-01 : f32
    %8 = vector.broadcast %cst_6 : f32 to vector<256x128xf32>
    %9 = arith.mulf %8, %5 : vector<256x128xf32>
    %10 = arith.select %7, %5, %9 : vector<256x128xi1>, vector<256x128xf32>
    %11 = arith.truncf %10 : vector<256x128xf32> to vector<256x128xbf16>
    %c0_7 = arith.constant 0 : index
    %c0_8 = arith.constant 0 : index
    %12 = vector.load %arg4[%c0_7, %c0_8] : memref<128x128xbf16, #tpu.memory_space<vmem>>, vector<128x128xbf16>
    %cst_9 = arith.constant dense<0.000000e+00> : vector<256x128xf32>
    %13 = tpu.matmul %11, %12, %cst_9 {dimension_numbers = #tpu.dot_dimension_numbers<[1], [0], [0], [1], [0, 0, 1, 1], [], []>} : vector<256x128xbf16>, vector<128x128xbf16>, vector<256x128xf32> -> vector<256x128xf32>
    %c0_10 = arith.constant 0 : index
    %c0_11 = arith.constant 0 : index
    %14 = vector.load %arg5[%c0_10, %c0_11] : memref<1x128xf32, #tpu.memory_space<vmem>>, vector<1x128xf32>
    %15 = vector.broadcast %14 : vector<1x128xf32> to vector<256x128xf32>
    %16 = arith.addf %13, %15 : vector<256x128xf32>
    %cst_12 = arith.constant 0.000000e+00 : f32
    %17 = vector.broadcast %cst_12 : f32 to vector<256x128xf32>
    %18 = arith.cmpf ogt, %16, %17 : vector<256x128xf32>
    %cst_13 = arith.constant 2.000000e-01 : f32
    %19 = vector.broadcast %cst_13 : f32 to vector<256x128xf32>
    %20 = arith.mulf %19, %16 : vector<256x128xf32>
    %21 = arith.select %18, %16, %20 : vector<256x128xi1>, vector<256x128xf32>
    %22 = arith.truncf %21 : vector<256x128xf32> to vector<256x128xbf16>
    %c0_14 = arith.constant 0 : index
    %c0_15 = arith.constant 0 : index
    %23 = vector.load %arg6[%c0_14, %c0_15] : memref<128x128xbf16, #tpu.memory_space<vmem>>, vector<128x128xbf16>
    %cst_16 = arith.constant dense<0.000000e+00> : vector<256x128xf32>
    %24 = tpu.matmul %22, %23, %cst_16 {dimension_numbers = #tpu.dot_dimension_numbers<[1], [0], [0], [1], [0, 0, 1, 1], [], []>} : vector<256x128xbf16>, vector<128x128xbf16>, vector<256x128xf32> -> vector<256x128xf32>
    %c0_17 = arith.constant 0 : index
    %c0_18 = arith.constant 0 : index
    %25 = vector.load %arg7[%c0_17, %c0_18] : memref<1x128xf32, #tpu.memory_space<vmem>>, vector<1x128xf32>
    %26 = vector.broadcast %25 : vector<1x128xf32> to vector<256x128xf32>
    %27 = arith.addf %24, %26 : vector<256x128xf32>
    %c0_19 = arith.constant 0 : index
    %c0_20 = arith.constant 0 : index
    %28 = vector.load %arg8[%c0_19, %c0_20] : memref<256x128xf32, #tpu.memory_space<vmem>>, vector<256x128xf32>
    tpu.vector_store %arg8[%c0_19, %c0_20], %27 {strides = array<i32>} : memref<256x128xf32, #tpu.memory_space<vmem>>, vector<256x128xf32>,
    return
  }
  func.func @transform_0(%arg0: i32) -> (i32, i32) {
    %c0_i32 = arith.constant 0 : i32
    %c0_i32_0 = arith.constant 0 : i32
    return %arg0, %c0_i32 : i32, i32
  }
  func.func @transform_1(%arg0: i32) -> (i32, i32) {
    %c0_i32 = arith.constant 0 : i32
    %c0_i32_0 = arith.constant 0 : i32
    %c0_i32_1 = arith.constant 0 : i32
    return %c0_i32, %c0_i32_0 : i32, i32
  }
  func.func @transform_2(%arg0: i32) -> (i32, i32) {
    %c0_i32 = arith.constant 0 : i32
    %c0_i32_0 = arith.constant 0 : i32
    %c0_i32_1 = arith.constant 0 : i32
    return %c0_i32, %c0_i32_0 : i32, i32
  }
  func.func @transform_3(%arg0: i32) -> (i32, i32) {
    %c0_i32 = arith.constant 0 : i32
    %c0_i32_0 = arith.constant 0 : i32
    %c0_i32_1 = arith.constant 0 : i32
    return %c0_i32, %c0_i32_0 : i32, i32
  }
  func.func @transform_4(%arg0: i32) -> (i32, i32) {
    %c0_i32 = arith.constant 0 : i32
    %c0_i32_0 = arith.constant 0 : i32
    %c0_i32_1 = arith.constant 0 : i32
    return %c0_i32, %c0_i32_0 : i32, i32
  }
  func.func @transform_5(%arg0: i32) -> (i32, i32) {
    %c0_i32 = arith.constant 0 : i32
    %c0_i32_0 = arith.constant 0 : i32
    %c0_i32_1 = arith.constant 0 : i32
    return %c0_i32, %c0_i32_0 : i32, i32
  }
  func.func @transform_6(%arg0: i32) -> (i32, i32) {
    %c0_i32 = arith.constant 0 : i32
    %c0_i32_0 = arith.constant 0 : i32
    %c0_i32_1 = arith.constant 0 : i32
    return %c0_i32, %c0_i32_0 : i32, i32
  }
  func.func @transform_7(%arg0: i32) -> (i32, i32) {
    %c0_i32 = arith.constant 0 : i32
    %c0_i32_0 = arith.constant 0 : i32
    return %arg0, %c0_i32 : i32, i32
  }
}

</mosaic_0001>

<llo_original>
// kernel: forward.1
$region0: #{forward.1}
  #allocation0 [shape = 'u32[]', space=smem, size = 0x4, offset = 0x4, fixed_abs, tag = 'smem constant byte address 0x4 - core index']
  #allocation1 [shape = 'u32[144,128]{1,0:T(1,128)}', space=vmem, size = 0x12000, scoped, tag = 'internal scratch']
  %s0 = inlined_call_operand.vmem [shape: bf16[256,128], index: 0, kind: input, shape index: {}]
  %s1 = inlined_call_operand.hbm [shape: bf16[128,128], index: 1, kind: input, shape index: {}]
  %s2 = inlined_call_operand.vmem [shape: f32[1,128], index: 2, kind: input, shape index: {}]
  %s3 = inlined_call_operand.vmem [shape: bf16[128,128], index: 3, kind: input, shape index: {}]
  %s4 = inlined_call_operand.vmem [shape: f32[1,128], index: 4, kind: input, shape index: {}]
  %s5 = inlined_call_operand.vmem [shape: bf16[128,128], index: 5, kind: input, shape index: {}]
  %s6 = inlined_call_operand.vmem [shape: f32[1,128], index: 6, kind: input, shape index: {}]
  %s7 = inlined_call_operand.vmem [shape: f32[256,128], index: 7, kind: output, shape index: {}]
  %s8 = sld [smem:[#allocation0]]
  $region42: #{forward.1} parent=0
    _
  %s10 = ssub.s32 1, %s8
  %s11 = scalar_select 0, %s10, %s8
  $region1: #{forward.1} parent=0
    #allocation2 [shape = 'u8[32768]{0}', space=vmem, size = 0x8000, scoped, tag = 'input window, operand 1, single buffered']
    #allocation3 [shape = 's32[1]{0}', space=sflag, size = 0x4, scoped, tag = 'scoped memory for forward.1']
    %12 = vsyncpa [#allocation3], 0
    // Predicated region
    $region2: #{forward.1} parent=1 // pred_check
      _
    $region3: #{forward.1} parent=1 // pred_check_branch
      %14 = sbr.rel (0) target = $region5
    $region4: #{forward.1} parent=1 // pred_region
      _
    $region5: #{forward.1} parent=1 // pred_fallthru
      _
    // Predicated region
    $region6: #{forward.1} parent=1 // pred_check
      _
    $region7: #{forward.1} parent=1 // pred_check_branch
      %16 = sbr.rel (0) target = $region9
    $region8: #{forward.1} parent=1 // pred_region
      %s18 = ssub.s32 1024, 1024
      %19 = vsyncadd [#allocation3], %s18
      %s20 = sshll.u32 [#allocation2], 4
      %s21 = int_to_ptr.vmem [resolvable:$true] %s20
      %26 = dma.hbm_to_vmem [thread:$0]  %s1, 1024, %s21, [#allocation3], 64, 64, 4
    $region9: #{forward.1} parent=1 // pred_fallthru
      _
    // Predicated region
    $region10: #{forward.1} parent=1 // pred_check
      _
    $region11: #{forward.1} parent=1 // pred_check_branch
      %28 = sbr.rel (0) target = $region13
    $region12: #{forward.1} parent=1 // pred_region
      _
    $region13: #{forward.1} parent=1 // pred_fallthru
      _
    // Predicated region
    $region14: #{forward.1} parent=1 // pred_check
      _
    $region15: #{forward.1} parent=1 // pred_check_branch
      %30 = sbr.rel (0) target = $region17
    $region16: #{forward.1} parent=1 // pred_region
      _
    $region17: #{forward.1} parent=1 // pred_fallthru
      _
    // Predicated region
    $region18: #{forward.1} parent=1 // pred_check
      _
    $region19: #{forward.1} parent=1 // pred_check_branch
      %32 = sbr.rel (0) target = $region21
    $region20: #{forward.1} parent=1 // pred_region
      _
    $region21: #{forward.1} parent=1 // pred_fallthru
      _
    // Predicated region
    $region22: #{forward.1} parent=1 // pred_check
      _
    $region23: #{forward.1} parent=1 // pred_check_branch
      %34 = sbr.rel (0) target = $region25
    $region24: #{forward.1} parent=1 // pred_region
      _
    $region25: #{forward.1} parent=1 // pred_fallthru
      _
    // Predicated region
    $region26: #{forward.1} parent=1 // pred_check
      _
    $region27: #{forward.1} parent=1 // pred_check_branch
      %36 = sbr.rel (0) target = $region29
    $region28: #{forward.1} parent=1 // pred_region
      _
    $region29: #{forward.1} parent=1 // pred_fallthru
      _
    // Predicated region
    $region30: #{forward.1} parent=1 // pred_check
      _
    $region31: #{forward.1} parent=1 // pred_check_branch
      %38 = sbr.rel (0) target = $region33
    $region32: #{forward.1} parent=1 // pred_region
      %39 = dma.done [#allocation3], 1024
    $region33: #{forward.1} parent=1 // pred_fallthru
      _
    %v41 = vld [vmem:[%s0] sm:$0xf]
    %v42 = vld [vmem:[%s0 + $0x4] sm:$0xf]
    %v43 = vld [vmem:[%s0 + $0x8] sm:$0xf]
    %v44 = vld [vmem:[%s0 + $0xc] sm:$0xf]
    %v45 = vld [vmem:[%s0 + $0x10] sm:$0xf]
    %v46 = vld [vmem:[%s0 + $0x14] sm:$0xf]
    %v47 = vld [vmem:[%s0 + $0x18] sm:$0xf]
    %v48 = vld [vmem:[%s0 + $0x1c] sm:$0xf]
    %v49 = vld [vmem:[%s0 + $0x20] sm:$0xf]
    %v50 = vld [vmem:[%s0 + $0x24] sm:$0xf]
    %v51 = vld [vmem:[%s0 + $0x28] sm:$0xf]
    %v52 = vld [vmem:[%s0 + $0x2c] sm:$0xf]
    %v53 = vld [vmem:[%s0 + $0x30] sm:$0xf]
    %v54 = vld [vmem:[%s0 + $0x34] sm:$0xf]
    %v55 = vld [vmem:[%s0 + $0x38] sm:$0xf]
    %v56 = vld [vmem:[%s0 + $0x3c] sm:$0xf]
    %v57 = vld [vmem:[%s0 + $0x40] sm:$0xf]
    %v58 = vld [vmem:[%s0 + $0x44] sm:$0xf]
    %v59 = vld [vmem:[%s0 + $0x48] sm:$0xf]
    %v60 = vld [vmem:[%s0 + $0x4c] sm:$0xf]
    %v61 = vld [vmem:[%s0 + $0x50] sm:$0xf]
    %v62 = vld [vmem:[%s0 + $0x54] sm:$0xf]
    %v63 = vld [vmem:[%s0 + $0x58] sm:$0xf]
    %v64 = vld [vmem:[%s0 + $0x5c] sm:$0xf]
    %v65 = vld [vmem:[%s0 + $0x60] sm:$0xf]
    %v66 = vld [vmem:[%s0 + $0x64] sm:$0xf]
    %v67 = vld [vmem:[%s0 + $0x68] sm:$0xf]
    %v68 = vld [vmem:[%s0 + $0x6c] sm:$0xf]
    %v69 = vld [vmem:[%s0 + $0x70] sm:$0xf]
    %v70 = vld [vmem:[%s0 + $0x74] sm:$0xf]
    %v71 = vld [vmem:[%s0 + $0x78] sm:$0xf]
    %v72 = vld [vmem:[%s0 + $0x7c] sm:$0xf]
    %v73 = vld [vmem:[#allocation2] sm:$0xf]
    %v74 = vld [vmem:[#allocation2 + $0x4] sm:$0xf]
    %v75 = vld [vmem:[#allocation2 + $0x8] sm:$0xf]
    %v76 = vld [vmem:[#allocation2 + $0xc] sm:$0xf]
    %v77 = vld [vmem:[#allocation2 + $0x10] sm:$0xf]
    %v78 = vld [vmem:[#allocation2 + $0x14] sm:$0xf]
    %v79 = vld [vmem:[#allocation2 + $0x18] sm:$0xf]
    %v80 = vld [vmem:[#allocation2 + $0x1c] sm:$0xf]
    %v81 = vld [vmem:[#allocation2 + $0x20] sm:$0xf]
    %v82 = vld [vmem:[#allocation2 + $0x24] sm:$0xf]
    %v83 = vld [vmem:[#allocation2 + $0x28] sm:$0xf]
    %v84 = vld [vmem:[#allocation2 + $0x2c] sm:$0xf]
    %v85 = vld [vmem:[#allocation2 + $0x30] sm:$0xf]
    %v86 = vld [vmem:[#allocation2 + $0x34] sm:$0xf]
    %v87 = vld [vmem:[#allocation2 + $0x38] sm:$0xf]
    %v88 = vld [vmem:[#allocation2 + $0x3c] sm:$0xf]
    %v89 = vld [vmem:[%s2] sm:$0x1]
    %v91 = vlaneseq
    %v92 = vshrl.u32 %v91, 7
    %v93 = vsub.s32 0, %v92
    %v94 = vrot.slane %v89, %v93
    %v128 = vunpack.c.l.b16 %v41
    %v129 = vunpack.c.l.b16 %v42
    %v130 = vunpack.c.l.b16 %v43
    %v131 = vunpack.c.l.b16 %v44
    %v132 = vunpack.c.l.b16 %v45
    %v133 = vunpack.c.l.b16 %v46
    %v134 = vunpack.c.l.b16 %v47
    %v135 = vunpack.c.l.b16 %v48
    %v136 = vunpack.c.l.b16 %v49
    %v137 = vunpack.c.l.b16 %v50
    %v138 = vunpack.c.l.b16 %v51
    %v139 = vunpack.c.l.b16 %v52
    %v140 = vunpack.c.l.b16 %v53
    %v141 = vunpack.c.l.b16 %v54
    %v142 = vunpack.c.l.b16 %v55
    %v143 = vunpack.c.l.b16 %v56
    %v144 = vunpack.c.l.b16 %v57
    %v145 = vunpack.c.l.b16 %v58
    %v146 = vunpack.c.l.b16 %v59
    %v147 = vunpack.c.l.b16 %v60
    %v148 = vunpack.c.l.b16 %v61
    %v149 = vunpack.c.l.b16 %v62
    %v150 = vunpack.c.l.b16 %v63
    %v151 = vunpack.c.l.b16 %v64
    %v152 = vunpack.c.l.b16 %v65
    %v153 = vunpack.c.l.b16 %v66
    %v154 = vunpack.c.l.b16 %v67
    %v155 = vunpack.c.l.b16 %v68
    %v156 = vunpack.c.l.b16 %v69
    %v157 = vunpack.c.l.b16 %v70
    %v158 = vunpack.c.l.b16 %v71
    %v159 = vunpack.c.l.b16 %v72
    %v160 = vpack.c.b16 %v129, %v128
    %v161 = vpack.c.b16 %v131, %v130
    %v162 = vpack.c.b16 %v133, %v132
    %v163 = vpack.c.b16 %v135, %v134
    %v164 = vpack.c.b16 %v137, %v136
    %v165 = vpack.c.b16 %v139, %v138
    %v166 = vpack.c.b16 %v141, %v140
    %v167 = vpack.c.b16 %v143, %v142
    %v168 = vpack.c.b16 %v145, %v144
    %v169 = vpack.c.b16 %v147, %v146
    %v170 = vpack.c.b16 %v149, %v148
    %v171 = vpack.c.b16 %v151, %v150
    %v172 = vpack.c.b16 %v153, %v152
    %v173 = vpack.c.b16 %v155, %v154
    %v174 = vpack.c.b16 %v157, %v156
    %v175 = vpack.c.b16 %v159, %v158
    %v208 = vunpack.c.l.b16 %v73
    %v209 = vunpack.c.l.b16 %v74
    %v210 = vunpack.c.l.b16 %v75
    %v211 = vunpack.c.l.b16 %v76
    %v212 = vunpack.c.l.b16 %v77
    %v213 = vunpack.c.l.b16 %v78
    %v214 = vunpack.c.l.b16 %v79
    %v215 = vunpack.c.l.b16 %v80
    %v216 = vunpack.c.l.b16 %v81
    %v217 = vunpack.c.l.b16 %v82
    %v218 = vunpack.c.l.b16 %v83
    %v219 = vunpack.c.l.b16 %v84
    %v220 = vunpack.c.l.b16 %v85
    %v221 = vunpack.c.l.b16 %v86
    %v222 = vunpack.c.l.b16 %v87
    %v223 = vunpack.c.l.b16 %v88
    %v224 = vpack.c.b16 %v209, %v208
    %v225 = vpack.c.b16 %v211, %v210
    %v226 = vpack.c.b16 %v213, %v212
    %v227 = vpack.c.b16 %v215, %v214
    %v228 = vpack.c.b16 %v217, %v216
    %v229 = vpack.c.b16 %v219, %v218
    %v230 = vpack.c.b16 %v221, %v220
    %v231 = vpack.c.b16 %v223, %v222
    %240 = vmatprep.subr.bf16.mxu0 0
    %241 = vmatpush1.bf16.msra.mxu0 %v231
    %242 = vmatprep.subr.bf16.mxu0 0
    %243 = vmatpush1.bf16.msra.mxu0 %v230
    %244 = vmatprep.subr.bf16.mxu0 0
    %245 = vmatpush1.bf16.msra.mxu0 %v229
    %246 = vmatprep.subr.bf16.mxu0 0
    %247 = vmatpush1.bf16.msra.mxu0 %v228
    %248 = vmatprep.subr.bf16.mxu0 0
    %249 = vmatpush1.bf16.msra.mxu0 %v227
    %250 = vmatprep.subr.bf16.mxu0 0
    %251 = vmatpush1.bf16.msra.mxu0 %v226
    %252 = vmatprep.subr.bf16.mxu0 0
    %253 = vmatpush1.bf16.msra.mxu0 %v225
    %254 = vmatprep.subr.bf16.mxu0 0
    %255 = vmatpush1.bf16.msra.mxu0 %v224
    %256 = vmatprep.subr.bf16.mxu0 0
    %257 = vmatpush2.bf16.msra.mxu0 0
    %258 = vmatprep.subr.bf16.mxu0 0
    %259 = vmatpush2.bf16.msra.mxu0 0
    %260 = vmatprep.subr.bf16.mxu0 0
    %261 = vmatpush2.bf16.msra.mxu0 0
    %262 = vmatprep.subr.bf16.mxu0 0
    %263 = vmatpush2.bf16.msra.mxu0 0
    %264 = vmatprep.subr.bf16.mxu0 0
    %265 = vmatpush2.bf16.msra.mxu0 0
    %266 = vmatprep.subr.bf16.mxu0 0
    %267 = vmatpush2.bf16.msra.mxu0 0
    %268 = vmatprep.subr.bf16.mxu0 0
    %269 = vmatpush2.bf16.msra.mxu0 0
    %270 = vmatprep.subr.bf16.mxu0 0
    %271 = vmatpush2.bf16.msra.mxu0 0
    %272 = vmatprep.mubr.bf16.mxu0 0
    %273 = vmatmul.mubr.bf16.gmra.mxu0 %v160
    %v274 = vpop.f32.mrf.mxu0
    %v275 = vadd.f32 %v94, %v274
    %v276 = vpop.f32.mrf.mxu0
    %v277 = vpop.f32.mrf.mxu0
    %v278 = vadd.f32 %v94, %v277
    %v279 = vpop.f32.mrf.mxu0
    %280 = vmatprep.mubr.bf16.mxu0 0
    %281 = vmatmul.mubr.bf16.gmra.mxu0 %v161
    %v282 = vpop.f32.mrf.mxu0
    %v283 = vadd.f32 %v94, %v282
    %v284 = vpop.f32.mrf.mxu0
    %v285 = vpop.f32.mrf.mxu0
    %v286 = vadd.f32 %v94, %v285
    %v287 = vpop.f32.mrf.mxu0
    %288 = vmatprep.mubr.bf16.mxu0 0
    %289 = vmatmul.mubr.bf16.gmra.mxu0 %v162
    %v290 = vpop.f32.mrf.mxu0
    %v291 = vadd.f32 %v94, %v290
    %v292 = vpop.f32.mrf.mxu0
    %v293 = vpop.f32.mrf.mxu0
    %v294 = vadd.f32 %v94, %v293
    %v295 = vpop.f32.mrf.mxu0
    %296 = vmatprep.mubr.bf16.mxu0 0
    %297 = vmatmul.mubr.bf16.gmra.mxu0 %v163
    %v298 = vpop.f32.mrf.mxu0
    %v299 = vadd.f32 %v94, %v298
    %v300 = vpop.f32.mrf.mxu0
    %v301 = vpop.f32.mrf.mxu0
    %v302 = vadd.f32 %v94, %v301
    %v303 = vpop.f32.mrf.mxu0
    %304 = vmatprep.mubr.bf16.mxu0 0
    %305 = vmatmul.mubr.bf16.gmra.mxu0 %v164
    %v306 = vpop.f32.mrf.mxu0
    %v307 = vadd.f32 %v94, %v306
    %v308 = vpop.f32.mrf.mxu0
    %v309 = vpop.f32.mrf.mxu0
    %v310 = vadd.f32 %v94, %v309
    %v311 = vpop.f32.mrf.mxu0
    %312 = vmatprep.mubr.bf16.mxu0 0
    %313 = vmatmul.mubr.bf16.gmra.mxu0 %v165
    %v314 = vpop.f32.mrf.mxu0
    %v315 = vadd.f32 %v94, %v314
    %v316 = vpop.f32.mrf.mxu0
    %v317 = vpop.f32.mrf.mxu0
    %v318 = vadd.f32 %v94, %v317
    %v319 = vpop.f32.mrf.mxu0
    %320 = vmatprep.mubr.bf16.mxu0 0
    %321 = vmatmul.mubr.bf16.gmra.mxu0 %v166
    %v322 = vpop.f32.mrf.mxu0
    %v323 = vadd.f32 %v94, %v322
    %v324 = vpop.f32.mrf.mxu0
    %v325 = vpop.f32.mrf.mxu0
    %v326 = vadd.f32 %v94, %v325
    %v327 = vpop.f32.mrf.mxu0
    %328 = vmatprep.mubr.bf16.mxu0 0
    %329 = vmatmul.mubr.bf16.gmra.mxu0 %v167
    %v330 = vpop.f32.mrf.mxu0
    %v331 = vadd.f32 %v94, %v330
    %v332 = vpop.f32.mrf.mxu0
    %v333 = vpop.f32.mrf.mxu0
    %v334 = vadd.f32 %v94, %v333
    %v335 = vpop.f32.mrf.mxu0
    %336 = vmatprep.mubr.bf16.mxu0 0
    %337 = vmatmul.mubr.bf16.gmra.mxu0 %v168
    %v338 = vpop.f32.mrf.mxu0
    %v339 = vadd.f32 %v94, %v338
    %v340 = vpop.f32.mrf.mxu0
    %v341 = vpop.f32.mrf.mxu0
    %v342 = vadd.f32 %v94, %v341
    %v343 = vpop.f32.mrf.mxu0
    %344 = vmatprep.mubr.bf16.mxu0 0
    %345 = vmatmul.mubr.bf16.gmra.mxu0 %v169
    %v346 = vpop.f32.mrf.mxu0
    %v347 = vadd.f32 %v94, %v346
    %v348 = vpop.f32.mrf.mxu0
    %v349 = vpop.f32.mrf.mxu0
    %v350 = vadd.f32 %v94, %v349
    %v351 = vpop.f32.mrf.mxu0
    %352 = vmatprep.mubr.bf16.mxu0 0
    %353 = vmatmul.mubr.bf16.gmra.mxu0 %v170
    %v354 = vpop.f32.mrf.mxu0
    %v355 = vadd.f32 %v94, %v354
    %v356 = vpop.f32.mrf.mxu0
    %v357 = vpop.f32.mrf.mxu0
    %v358 = vadd.f32 %v94, %v357
    %v359 = vpop.f32.mrf.mxu0
    %360 = vmatprep.mubr.bf16.mxu0 0
    %361 = vmatmul.mubr.bf16.gmra.mxu0 %v171
    %v362 = vpop.f32.mrf.mxu0
    %v363 = vadd.f32 %v94, %v362
    %v364 = vpop.f32.mrf.mxu0
    %v365 = vpop.f32.mrf.mxu0
    %v366 = vadd.f32 %v94, %v365
    %v367 = vpop.f32.mrf.mxu0
    %368 = vmatprep.mubr.bf16.mxu0 0
    %369 = vmatmul.mubr.bf16.gmra.mxu0 %v172
    %v370 = vpop.f32.mrf.mxu0
    %v371 = vadd.f32 %v94, %v370
    %v372 = vpop.f32.mrf.mxu0
    %v373 = vpop.f32.mrf.mxu0
    %v374 = vadd.f32 %v94, %v373
    %v375 = vpop.f32.mrf.mxu0
    %376 = vmatprep.mubr.bf16.mxu0 0
    %377 = vmatmul.mubr.bf16.gmra.mxu0 %v173
    %v378 = vpop.f32.mrf.mxu0
    %v379 = vadd.f32 %v94, %v378
    %v380 = vpop.f32.mrf.mxu0
    %v381 = vpop.f32.mrf.mxu0
    %v382 = vadd.f32 %v94, %v381
    %v383 = vpop.f32.mrf.mxu0
    %384 = vmatprep.mubr.bf16.mxu0 0
    %385 = vmatmul.mubr.bf16.gmra.mxu0 %v174
    %v386 = vpop.f32.mrf.mxu0
    %v387 = vadd.f32 %v94, %v386
    %v388 = vpop.f32.mrf.mxu0
    %v389 = vpop.f32.mrf.mxu0
    %v390 = vadd.f32 %v94, %v389
    %v391 = vpop.f32.mrf.mxu0
    %392 = vmatprep.mubr.bf16.mxu0 0
    %393 = vmatmul.mubr.bf16.gmra.mxu0 %v175
    %v394 = vpop.f32.mrf.mxu0
    %v395 = vadd.f32 %v94, %v394
    %v396 = vpop.f32.mrf.mxu0
    %v397 = vpop.f32.mrf.mxu0
    %v398 = vadd.f32 %v94, %v397
    %v399 = vpop.f32.mrf.mxu0
    %400 = vdwg.mxu0
    %vm401 = vcmp.gt.f32.partialorder %v275, 0.0
    %vm402 = vcmp.gt.f32.partialorder %v278, 0.0
    %vm403 = vcmp.gt.f32.partialorder %v283, 0.0
    %vm404 = vcmp.gt.f32.partialorder %v286, 0.0
    %vm405 = vcmp.gt.f32.partialorder %v291, 0.0
    %vm406 = vcmp.gt.f32.partialorder %v294, 0.0
    %vm407 = vcmp.gt.f32.partialorder %v299, 0.0
    %vm408 = vcmp.gt.f32.partialorder %v302, 0.0
    %vm409 = vcmp.gt.f32.partialorder %v307, 0.0
    %vm410 = vcmp.gt.f32.partialorder %v310, 0.0
    %vm411 = vcmp.gt.f32.partialorder %v315, 0.0
    %vm412 = vcmp.gt.f32.partialorder %v318, 0.0
    %vm413 = vcmp.gt.f32.partialorder %v323, 0.0
    %vm414 = vcmp.gt.f32.partialorder %v326, 0.0
    %vm415 = vcmp.gt.f32.partialorder %v331, 0.0
    %vm416 = vcmp.gt.f32.partialorder %v334, 0.0
    %vm417 = vcmp.gt.f32.partialorder %v339, 0.0
    %vm418 = vcmp.gt.f32.partialorder %v342, 0.0
    %vm419 = vcmp.gt.f32.partialorder %v347, 0.0
    %vm420 = vcmp.gt.f32.partialorder %v350, 0.0
    %vm421 = vcmp.gt.f32.partialorder %v355, 0.0
    %vm422 = vcmp.gt.f32.partialorder %v358, 0.0
    %vm423 = vcmp.gt.f32.partialorder %v363, 0.0
    %vm424 = vcmp.gt.f32.partialorder %v366, 0.0
    %vm425 = vcmp.gt.f32.partialorder %v371, 0.0
    %vm426 = vcmp.gt.f32.partialorder %v374, 0.0
    %vm427 = vcmp.gt.f32.partialorder %v379, 0.0
    %vm428 = vcmp.gt.f32.partialorder %v382, 0.0
    %vm429 = vcmp.gt.f32.partialorder %v387, 0.0
    %vm430 = vcmp.gt.f32.partialorder %v390, 0.0
    %vm431 = vcmp.gt.f32.partialorder %v395, 0.0
    %vm432 = vcmp.gt.f32.partialorder %v398, 0.0
    %v433 = vmul.f32 %v275, 0.2
    %v434 = vmul.f32 %v278, 0.2
    %v435 = vmul.f32 %v283, 0.2
    %v436 = vmul.f32 %v286, 0.2
    %v437 = vmul.f32 %v291, 0.2
    %v438 = vmul.f32 %v294, 0.2
    %v439 = vmul.f32 %v299, 0.2
    %v440 = vmul.f32 %v302, 0.2
    %v441 = vmul.f32 %v307, 0.2
    %v442 = vmul.f32 %v310, 0.2
    %v443 = vmul.f32 %v315, 0.2
    %v444 = vmul.f32 %v318, 0.2
    %v445 = vmul.f32 %v323, 0.2
    %v446 = vmul.f32 %v326, 0.2
    %v447 = vmul.f32 %v331, 0.2
    %v448 = vmul.f32 %v334, 0.2
    %v449 = vmul.f32 %v339, 0.2
    %v450 = vmul.f32 %v342, 0.2
    %v451 = vmul.f32 %v347, 0.2
    %v452 = vmul.f32 %v350, 0.2
    %v453 = vmul.f32 %v355, 0.2
    %v454 = vmul.f32 %v358, 0.2
    %v455 = vmul.f32 %v363, 0.2
    %v456 = vmul.f32 %v366, 0.2
    %v457 = vmul.f32 %v371, 0.2
    %v458 = vmul.f32 %v374, 0.2
    %v459 = vmul.f32 %v379, 0.2
    %v460 = vmul.f32 %v382, 0.2
    %v461 = vmul.f32 %v387, 0.2
    %v462 = vmul.f32 %v390, 0.2
    %v463 = vmul.f32 %v395, 0.2
    %v464 = vmul.f32 %v398, 0.2
    %v465 = vsel %vm401, %v275, %v433
    %v466 = vsel %vm402, %v278, %v434
    %v467 = vsel %vm403, %v283, %v435
    %v468 = vsel %vm404, %v286, %v436
    %v469 = vsel %vm405, %v291, %v437
    %v470 = vsel %vm406, %v294, %v438
    %v471 = vsel %vm407, %v299, %v439
    %v472 = vsel %vm408, %v302, %v440
    %v473 = vsel %vm409, %v307, %v441
    %v474 = vsel %vm410, %v310, %v442
    %v475 = vsel %vm411, %v315, %v443
    %v476 = vsel %vm412, %v318, %v444
    %v477 = vsel %vm413, %v323, %v445
    %v478 = vsel %vm414, %v326, %v446
    %v479 = vsel %vm415, %v331, %v447
    %v480 = vsel %vm416, %v334, %v448
    %v481 = vsel %vm417, %v339, %v449
    %v482 = vsel %vm418, %v342, %v450
    %v483 = vsel %vm419, %v347, %v451
    %v484 = vsel %vm420, %v350, %v452
    %v485 = vsel %vm421, %v355, %v453
    %v486 = vsel %vm422, %v358, %v454
    %v487 = vsel %vm423, %v363, %v455
    %v488 = vsel %vm424, %v366, %v456
    %v489 = vsel %vm425, %v371, %v457
    %v490 = vsel %vm426, %v374, %v458
    %v491 = vsel %vm427, %v379, %v459
    %v492 = vsel %vm428, %v382, %v460
    %v493 = vsel %vm429, %v387, %v461
    %v494 = vsel %vm430, %v390, %v462
    %v495 = vsel %vm431, %v395, %v463
    %v496 = vsel %vm432, %v398, %v464
    %v497 = vpack.c.bf16 %v466, %v465
    %v498 = vpack.c.bf16 %v468, %v467
    %v499 = vpack.c.bf16 %v470, %v469
    %v500 = vpack.c.bf16 %v472, %v471
    %v501 = vpack.c.bf16 %v474, %v473
    %v502 = vpack.c.bf16 %v476, %v475
    %v503 = vpack.c.bf16 %v478, %v477
    %v504 = vpack.c.bf16 %v480, %v479
    %v505 = vpack.c.bf16 %v482, %v481
    %v506 = vpack.c.bf16 %v484, %v483
    %v507 = vpack.c.bf16 %v486, %v485
    %v508 = vpack.c.bf16 %v488, %v487
    %v509 = vpack.c.bf16 %v490, %v489
    %v510 = vpack.c.bf16 %v492, %v491
    %v511 = vpack.c.bf16 %v494, %v493
    %v512 = vpack.c.bf16 %v496, %v495
    %v513 = vld [vmem:[%s3] sm:$0xf]
    %v514 = vld [vmem:[%s3 + $0x4] sm:$0xf]
    %v515 = vld [vmem:[%s3 + $0x8] sm:$0xf]
    %v516 = vld [vmem:[%s3 + $0xc] sm:$0xf]
    %v517 = vld [vmem:[%s3 + $0x10] sm:$0xf]
    %v518 = vld [vmem:[%s3 + $0x14] sm:$0xf]
    %v519 = vld [vmem:[%s3 + $0x18] sm:$0xf]
    %v520 = vld [vmem:[%s3 + $0x1c] sm:$0xf]
    %v521 = vld [vmem:[%s3 + $0x20] sm:$0xf]
    %v522 = vld [vmem:[%s3 + $0x24] sm:$0xf]
    %v523 = vld [vmem:[%s3 + $0x28] sm:$0xf]
    %v524 = vld [vmem:[%s3 + $0x2c] sm:$0xf]
    %v525 = vld [vmem:[%s3 + $0x30] sm:$0xf]
    %v526 = vld [vmem:[%s3 + $0x34] sm:$0xf]
    %v527 = vld [vmem:[%s3 + $0x38] sm:$0xf]
    %v528 = vld [vmem:[%s3 + $0x3c] sm:$0xf]
    %v529 = vld [vmem:[%s4] sm:$0x1]
    %v531 = vlaneseq
    %v532 = vshrl.u32 %v531, 7
    %v533 = vsub.s32 0, %v532
    %v534 = vrot.slane %v529, %v533
    %v552 = vunpack.c.l.b16 %v513
    %v553 = vunpack.c.l.b16 %v514
    %v554 = vunpack.c.l.b16 %v515
    %v555 = vunpack.c.l.b16 %v516
    %v556 = vunpack.c.l.b16 %v517
    %v557 = vunpack.c.l.b16 %v518
    %v558 = vunpack.c.l.b16 %v519
    %v559 = vunpack.c.l.b16 %v520
    %v560 = vunpack.c.l.b16 %v521
    %v561 = vunpack.c.l.b16 %v522
    %v562 = vunpack.c.l.b16 %v523
    %v563 = vunpack.c.l.b16 %v524
    %v564 = vunpack.c.l.b16 %v525
    %v565 = vunpack.c.l.b16 %v526
    %v566 = vunpack.c.l.b16 %v527
    %v567 = vunpack.c.l.b16 %v528
    %v568 = vpack.c.b16 %v553, %v552
    %v569 = vpack.c.b16 %v555, %v554
    %v570 = vpack.c.b16 %v557, %v556
    %v571 = vpack.c.b16 %v559, %v558
    %v572 = vpack.c.b16 %v561, %v560
    %v573 = vpack.c.b16 %v563, %v562
    %v574 = vpack.c.b16 %v565, %v564
    %v575 = vpack.c.b16 %v567, %v566
    %584 = vmatprep.subr.bf16.mxu0 0
    %585 = vmatpush1.bf16.msra.mxu0 %v575
    %586 = vmatprep.subr.bf16.mxu0 0
    %587 = vmatpush1.bf16.msra.mxu0 %v574
    %588 = vmatprep.subr.bf16.mxu0 0
    %589 = vmatpush1.bf16.msra.mxu0 %v573
    %590 = vmatprep.subr.bf16.mxu0 0
    %591 = vmatpush1.bf16.msra.mxu0 %v572
    %592 = vmatprep.subr.bf16.mxu0 0
    %593 = vmatpush1.bf16.msra.mxu0 %v571
    %594 = vmatprep.subr.bf16.mxu0 0
    %595 = vmatpush1.bf16.msra.mxu0 %v570
    %596 = vmatprep.subr.bf16.mxu0 0
    %597 = vmatpush1.bf16.msra.mxu0 %v569
    %598 = vmatprep.subr.bf16.mxu0 0
    %599 = vmatpush1.bf16.msra.mxu0 %v568
    %600 = vmatprep.subr.bf16.mxu0 0
    %601 = vmatpush2.bf16.msra.mxu0 0
    %602 = vmatprep.subr.bf16.mxu0 0
    %603 = vmatpush2.bf16.msra.mxu0 0
    %604 = vmatprep.subr.bf16.mxu0 0
    %605 = vmatpush2.bf16.msra.mxu0 0
    %606 = vmatprep.subr.bf16.mxu0 0
    %607 = vmatpush2.bf16.msra.mxu0 0
    %608 = vmatprep.subr.bf16.mxu0 0
    %609 = vmatpush2.bf16.msra.mxu0 0
    %610 = vmatprep.subr.bf16.mxu0 0
    %611 = vmatpush2.bf16.msra.mxu0 0
    %612 = vmatprep.subr.bf16.mxu0 0
    %613 = vmatpush2.bf16.msra.mxu0 0
    %614 = vmatprep.subr.bf16.mxu0 0
    %615 = vmatpush2.bf16.msra.mxu0 0
    %616 = vmatprep.mubr.bf16.mxu0 0
    %617 = vmatmul.mubr.bf16.gmra.mxu0 %v497
    %v618 = vpop.f32.mrf.mxu0
    %v619 = vadd.f32 %v534, %v618
    %v620 = vpop.f32.mrf.mxu0
    %v621 = vpop.f32.mrf.mxu0
    %v622 = vadd.f32 %v534, %v621
    %v623 = vpop.f32.mrf.mxu0
    %624 = vmatprep.mubr.bf16.mxu0 0
    %625 = vmatmul.mubr.bf16.gmra.mxu0 %v498
    %v626 = vpop.f32.mrf.mxu0
    %v627 = vadd.f32 %v534, %v626
    %v628 = vpop.f32.mrf.mxu0
    %v629 = vpop.f32.mrf.mxu0
    %v630 = vadd.f32 %v534, %v629
    %v631 = vpop.f32.mrf.mxu0
    %632 = vmatprep.mubr.bf16.mxu0 0
    %633 = vmatmul.mubr.bf16.gmra.mxu0 %v499
    %v634 = vpop.f32.mrf.mxu0
    %v635 = vadd.f32 %v534, %v634
    %v636 = vpop.f32.mrf.mxu0
    %v637 = vpop.f32.mrf.mxu0
    %v638 = vadd.f32 %v534, %v637
    %v639 = vpop.f32.mrf.mxu0
    %640 = vmatprep.mubr.bf16.mxu0 0
    %641 = vmatmul.mubr.bf16.gmra.mxu0 %v500
    %v642 = vpop.f32.mrf.mxu0
    %v643 = vadd.f32 %v534, %v642
    %v644 = vpop.f32.mrf.mxu0
    %v645 = vpop.f32.mrf.mxu0
    %v646 = vadd.f32 %v534, %v645
    %v647 = vpop.f32.mrf.mxu0
    %648 = vmatprep.mubr.bf16.mxu0 0
    %649 = vmatmul.mubr.bf16.gmra.mxu0 %v501
    %v650 = vpop.f32.mrf.mxu0
    %v651 = vadd.f32 %v534, %v650
    %v652 = vpop.f32.mrf.mxu0
    %v653 = vpop.f32.mrf.mxu0
    %v654 = vadd.f32 %v534, %v653
    %v655 = vpop.f32.mrf.mxu0
    %656 = vmatprep.mubr.bf16.mxu0 0
    %657 = vmatmul.mubr.bf16.gmra.mxu0 %v502
    %v658 = vpop.f32.mrf.mxu0
    %v659 = vadd.f32 %v534, %v658
    %v660 = vpop.f32.mrf.mxu0
    %v661 = vpop.f32.mrf.mxu0
    %v662 = vadd.f32 %v534, %v661
    %v663 = vpop.f32.mrf.mxu0
    %664 = vmatprep.mubr.bf16.mxu0 0
    %665 = vmatmul.mubr.bf16.gmra.mxu0 %v503
    %v666 = vpop.f32.mrf.mxu0
    %v667 = vadd.f32 %v534, %v666
    %v668 = vpop.f32.mrf.mxu0
    %v669 = vpop.f32.mrf.mxu0
    %v670 = vadd.f32 %v534, %v669
    %v671 = vpop.f32.mrf.mxu0
    %672 = vmatprep.mubr.bf16.mxu0 0
    %673 = vmatmul.mubr.bf16.gmra.mxu0 %v504
    %v674 = vpop.f32.mrf.mxu0
    %v675 = vadd.f32 %v534, %v674
    %v676 = vpop.f32.mrf.mxu0
    %v677 = vpop.f32.mrf.mxu0
    %v678 = vadd.f32 %v534, %v677
    %v679 = vpop.f32.mrf.mxu0
    %680 = vmatprep.mubr.bf16.mxu0 0
    %681 = vmatmul.mubr.bf16.gmra.mxu0 %v505
    %v682 = vpop.f32.mrf.mxu0
    %v683 = vadd.f32 %v534, %v682
    %v684 = vpop.f32.mrf.mxu0
    %v685 = vpop.f32.mrf.mxu0
    %v686 = vadd.f32 %v534, %v685
    %v687 = vpop.f32.mrf.mxu0
    %688 = vmatprep.mubr.bf16.mxu0 0
    %689 = vmatmul.mubr.bf16.gmra.mxu0 %v506
    %v690 = vpop.f32.mrf.mxu0
    %v691 = vadd.f32 %v534, %v690
    %v692 = vpop.f32.mrf.mxu0
    %v693 = vpop.f32.mrf.mxu0
    %v694 = vadd.f32 %v534, %v693
    %v695 = vpop.f32.mrf.mxu0
    %696 = vmatprep.mubr.bf16.mxu0 0
    %697 = vmatmul.mubr.bf16.gmra.mxu0 %v507
    %v698 = vpop.f32.mrf.mxu0
    %v699 = vadd.f32 %v534, %v698
    %v700 = vpop.f32.mrf.mxu0
    %v701 = vpop.f32.mrf.mxu0
    %v702 = vadd.f32 %v534, %v701
    %v703 = vpop.f32.mrf.mxu0
    %704 = vmatprep.mubr.bf16.mxu0 0
    %705 = vmatmul.mubr.bf16.gmra.mxu0 %v508
    %v706 = vpop.f32.mrf.mxu0
    %v707 = vadd.f32 %v534, %v706
    %v708 = vpop.f32.mrf.mxu0
    %v709 = vpop.f32.mrf.mxu0
    %v710 = vadd.f32 %v534, %v709
    %v711 = vpop.f32.mrf.mxu0
    %712 = vmatprep.mubr.bf16.mxu0 0
    %713 = vmatmul.mubr.bf16.gmra.mxu0 %v509
    %v714 = vpop.f32.mrf.mxu0
    %v715 = vadd.f32 %v534, %v714
    %v716 = vpop.f32.mrf.mxu0
    %v717 = vpop.f32.mrf.mxu0
    %v718 = vadd.f32 %v534, %v717
    %v719 = vpop.f32.mrf.mxu0
    %720 = vmatprep.mubr.bf16.mxu0 0
    %721 = vmatmul.mubr.bf16.gmra.mxu0 %v510
    %v722 = vpop.f32.mrf.mxu0
    %v723 = vadd.f32 %v534, %v722
    %v724 = vpop.f32.mrf.mxu0
    %v725 = vpop.f32.mrf.mxu0
    %v726 = vadd.f32 %v534, %v725
    %v727 = vpop.f32.mrf.mxu0
    %728 = vmatprep.mubr.bf16.mxu0 0
    %729 = vmatmul.mubr.bf16.gmra.mxu0 %v511
    %v730 = vpop.f32.mrf.mxu0
    %v731 = vadd.f32 %v534, %v730
    %v732 = vpop.f32.mrf.mxu0
    %v733 = vpop.f32.mrf.mxu0
    %v734 = vadd.f32 %v534, %v733
    %v735 = vpop.f32.mrf.mxu0
    %736 = vmatprep.mubr.bf16.mxu0 0
    %737 = vmatmul.mubr.bf16.gmra.mxu0 %v512
    %v738 = vpop.f32.mrf.mxu0
    %v739 = vadd.f32 %v534, %v738
    %v740 = vpop.f32.mrf.mxu0
    %v741 = vpop.f32.mrf.mxu0
    %v742 = vadd.f32 %v534, %v741
    %v743 = vpop.f32.mrf.mxu0
    %744 = vdwg.mxu0
    %vm745 = vcmp.gt.f32.partialorder %v619, 0.0
    %vm746 = vcmp.gt.f32.partialorder %v622, 0.0
    %vm747 = vcmp.gt.f32.partialorder %v627, 0.0
    %vm748 = vcmp.gt.f32.partialorder %v630, 0.0
    %vm749 = vcmp.gt.f32.partialorder %v635, 0.0
    %vm750 = vcmp.gt.f32.partialorder %v638, 0.0
    %vm751 = vcmp.gt.f32.partialorder %v643, 0.0
    %vm752 = vcmp.gt.f32.partialorder %v646, 0.0
    %vm753 = vcmp.gt.f32.partialorder %v651, 0.0
    %vm754 = vcmp.gt.f32.partialorder %v654, 0.0
    %vm755 = vcmp.gt.f32.partialorder %v659, 0.0
    %vm756 = vcmp.gt.f32.partialorder %v662, 0.0
    %vm757 = vcmp.gt.f32.partialorder %v667, 0.0
    %vm758 = vcmp.gt.f32.partialorder %v670, 0.0
    %vm759 = vcmp.gt.f32.partialorder %v675, 0.0
    %vm760 = vcmp.gt.f32.partialorder %v678, 0.0
    %vm761 = vcmp.gt.f32.partialorder %v683, 0.0
    %vm762 = vcmp.gt.f32.partialorder %v686, 0.0
    %vm763 = vcmp.gt.f32.partialorder %v691, 0.0
    %vm764 = vcmp.gt.f32.partialorder %v694, 0.0
    %vm765 = vcmp.gt.f32.partialorder %v699, 0.0
    %vm766 = vcmp.gt.f32.partialorder %v702, 0.0
    %vm767 = vcmp.gt.f32.partialorder %v707, 0.0
    %vm768 = vcmp.gt.f32.partialorder %v710, 0.0
    %vm769 = vcmp.gt.f32.partialorder %v715, 0.0
    %vm770 = vcmp.gt.f32.partialorder %v718, 0.0
    %vm771 = vcmp.gt.f32.partialorder %v723, 0.0
    %vm772 = vcmp.gt.f32.partialorder %v726, 0.0
    %vm773 = vcmp.gt.f32.partialorder %v731, 0.0
    %vm774 = vcmp.gt.f32.partialorder %v734, 0.0
    %vm775 = vcmp.gt.f32.partialorder %v739, 0.0
    %vm776 = vcmp.gt.f32.partialorder %v742, 0.0
    %v777 = vmul.f32 %v619, 0.2
    %v778 = vmul.f32 %v622, 0.2
    %v779 = vmul.f32 %v627, 0.2
    %v780 = vmul.f32 %v630, 0.2
    %v781 = vmul.f32 %v635, 0.2
    %v782 = vmul.f32 %v638, 0.2
    %v783 = vmul.f32 %v643, 0.2
    %v784 = vmul.f32 %v646, 0.2
    %v785 = vmul.f32 %v651, 0.2
    %v786 = vmul.f32 %v654, 0.2
    %v787 = vmul.f32 %v659, 0.2
    %v788 = vmul.f32 %v662, 0.2
    %v789 = vmul.f32 %v667, 0.2
    %v790 = vmul.f32 %v670, 0.2
    %v791 = vmul.f32 %v675, 0.2
    %v792 = vmul.f32 %v678, 0.2
    %v793 = vmul.f32 %v683, 0.2
    %v794 = vmul.f32 %v686, 0.2
    %v795 = vmul.f32 %v691, 0.2
    %v796 = vmul.f32 %v694, 0.2
    %v797 = vmul.f32 %v699, 0.2
    %v798 = vmul.f32 %v702, 0.2
    %v799 = vmul.f32 %v707, 0.2
    %v800 = vmul.f32 %v710, 0.2
    %v801 = vmul.f32 %v715, 0.2
    %v802 = vmul.f32 %v718, 0.2
    %v803 = vmul.f32 %v723, 0.2
    %v804 = vmul.f32 %v726, 0.2
    %v805 = vmul.f32 %v731, 0.2
    %v806 = vmul.f32 %v734, 0.2
    %v807 = vmul.f32 %v739, 0.2
    %v808 = vmul.f32 %v742, 0.2
    %v809 = vsel %vm745, %v619, %v777
    %v810 = vsel %vm746, %v622, %v778
    %v811 = vsel %vm747, %v627, %v779
    %v812 = vsel %vm748, %v630, %v780
    %v813 = vsel %vm749, %v635, %v781
    %v814 = vsel %vm750, %v638, %v782
    %v815 = vsel %vm751, %v643, %v783
    %v816 = vsel %vm752, %v646, %v784
    %v817 = vsel %vm753, %v651, %v785
    %v818 = vsel %vm754, %v654, %v786
    %v819 = vsel %vm755, %v659, %v787
    %v820 = vsel %vm756, %v662, %v788
    %v821 = vsel %vm757, %v667, %v789
    %v822 = vsel %vm758, %v670, %v790
    %v823 = vsel %vm759, %v675, %v791
    %v824 = vsel %vm760, %v678, %v792
    %v825 = vsel %vm761, %v683, %v793
    %v826 = vsel %vm762, %v686, %v794
    %v827 = vsel %vm763, %v691, %v795
    %v828 = vsel %vm764, %v694, %v796
    %v829 = vsel %vm765, %v699, %v797
    %v830 = vsel %vm766, %v702, %v798
    %v831 = vsel %vm767, %v707, %v799
    %v832 = vsel %vm768, %v710, %v800
    %v833 = vsel %vm769, %v715, %v801
    %v834 = vsel %vm770, %v718, %v802
    %v835 = vsel %vm771, %v723, %v803
    %v836 = vsel %vm772, %v726, %v804
    %v837 = vsel %vm773, %v731, %v805
    %v838 = vsel %vm774, %v734, %v806
    %v839 = vsel %vm775, %v739, %v807
    %v840 = vsel %vm776, %v742, %v808
    %v841 = vpack.c.bf16 %v810, %v809
    %v842 = vpack.c.bf16 %v812, %v811
    %v843 = vpack.c.bf16 %v814, %v813
    %v844 = vpack.c.bf16 %v816, %v815
    %v845 = vpack.c.bf16 %v818, %v817
    %v846 = vpack.c.bf16 %v820, %v819
    %v847 = vpack.c.bf16 %v822, %v821
    %v848 = vpack.c.bf16 %v824, %v823
    %v849 = vpack.c.bf16 %v826, %v825
    %v850 = vpack.c.bf16 %v828, %v827
    %v851 = vpack.c.bf16 %v830, %v829
    %v852 = vpack.c.bf16 %v832, %v831
    %v853 = vpack.c.bf16 %v834, %v833
    %v854 = vpack.c.bf16 %v836, %v835
    %v855 = vpack.c.bf16 %v838, %v837
    %v856 = vpack.c.bf16 %v840, %v839
    %v857 = vld [vmem:[%s5] sm:$0xf]
    %v858 = vld [vmem:[%s5 + $0x4] sm:$0xf]
    %v859 = vld [vmem:[%s5 + $0x8] sm:$0xf]
    %v860 = vld [vmem:[%s5 + $0xc] sm:$0xf]
    %v861 = vld [vmem:[%s5 + $0x10] sm:$0xf]
    %v862 = vld [vmem:[%s5 + $0x14] sm:$0xf]
    %v863 = vld [vmem:[%s5 + $0x18] sm:$0xf]
    %v864 = vld [vmem:[%s5 + $0x1c] sm:$0xf]
    %v865 = vld [vmem:[%s5 + $0x20] sm:$0xf]
    %v866 = vld [vmem:[%s5 + $0x24] sm:$0xf]
    %v867 = vld [vmem:[%s5 + $0x28] sm:$0xf]
    %v868 = vld [vmem:[%s5 + $0x2c] sm:$0xf]
    %v869 = vld [vmem:[%s5 + $0x30] sm:$0xf]
    %v870 = vld [vmem:[%s5 + $0x34] sm:$0xf]
    %v871 = vld [vmem:[%s5 + $0x38] sm:$0xf]
    %v872 = vld [vmem:[%s5 + $0x3c] sm:$0xf]
    %v873 = vld [vmem:[%s6] sm:$0x1]
    %v875 = vlaneseq
    %v876 = vshrl.u32 %v875, 7
    %v877 = vsub.s32 0, %v876
    %v878 = vrot.slane %v873, %v877
    %v896 = vunpack.c.l.b16 %v857
    %v897 = vunpack.c.l.b16 %v858
    %v898 = vunpack.c.l.b16 %v859
    %v899 = vunpack.c.l.b16 %v860
    %v900 = vunpack.c.l.b16 %v861
    %v901 = vunpack.c.l.b16 %v862
    %v902 = vunpack.c.l.b16 %v863
    %v903 = vunpack.c.l.b16 %v864
    %v904 = vunpack.c.l.b16 %v865
    %v905 = vunpack.c.l.b16 %v866
    %v906 = vunpack.c.l.b16 %v867
    %v907 = vunpack.c.l.b16 %v868
    %v908 = vunpack.c.l.b16 %v869
    %v909 = vunpack.c.l.b16 %v870
    %v910 = vunpack.c.l.b16 %v871
    %v911 = vunpack.c.l.b16 %v872
    %v912 = vpack.c.b16 %v897, %v896
    %v913 = vpack.c.b16 %v899, %v898
    %v914 = vpack.c.b16 %v901, %v900
    %v915 = vpack.c.b16 %v903, %v902
    %v916 = vpack.c.b16 %v905, %v904
    %v917 = vpack.c.b16 %v907, %v906
    %v918 = vpack.c.b16 %v909, %v908
    %v919 = vpack.c.b16 %v911, %v910
    %928 = vmatprep.subr.bf16.mxu0 0
    %929 = vmatpush1.bf16.msra.mxu0 %v919
    %930 = vmatprep.subr.bf16.mxu0 0
    %931 = vmatpush1.bf16.msra.mxu0 %v918
    %932 = vmatprep.subr.bf16.mxu0 0
    %933 = vmatpush1.bf16.msra.mxu0 %v917
    %934 = vmatprep.subr.bf16.mxu0 0
    %935 = vmatpush1.bf16.msra.mxu0 %v916
    %936 = vmatprep.subr.bf16.mxu0 0
    %937 = vmatpush1.bf16.msra.mxu0 %v915
    %938 = vmatprep.subr.bf16.mxu0 0
    %939 = vmatpush1.bf16.msra.mxu0 %v914
    %940 = vmatprep.subr.bf16.mxu0 0
    %941 = vmatpush1.bf16.msra.mxu0 %v913
    %942 = vmatprep.subr.bf16.mxu0 0
    %943 = vmatpush1.bf16.msra.mxu0 %v912
    %944 = vmatprep.subr.bf16.mxu0 0
    %945 = vmatpush2.bf16.msra.mxu0 0
    %946 = vmatprep.subr.bf16.mxu0 0
    %947 = vmatpush2.bf16.msra.mxu0 0
    %948 = vmatprep.subr.bf16.mxu0 0
    %949 = vmatpush2.bf16.msra.mxu0 0
    %950 = vmatprep.subr.bf16.mxu0 0
    %951 = vmatpush2.bf16.msra.mxu0 0
    %952 = vmatprep.subr.bf16.mxu0 0
    %953 = vmatpush2.bf16.msra.mxu0 0
    %954 = vmatprep.subr.bf16.mxu0 0
    %955 = vmatpush2.bf16.msra.mxu0 0
    %956 = vmatprep.subr.bf16.mxu0 0
    %957 = vmatpush2.bf16.msra.mxu0 0
    %958 = vmatprep.subr.bf16.mxu0 0
    %959 = vmatpush2.bf16.msra.mxu0 0
    %960 = vmatprep.mubr.bf16.mxu0 0
    %961 = vmatmul.mubr.bf16.gmra.mxu0 %v841
    %v962 = vpop.f32.mrf.mxu0
    %v963 = vadd.f32 %v878, %v962
    %v964 = vpop.f32.mrf.mxu0
    %v965 = vpop.f32.mrf.mxu0
    %v966 = vadd.f32 %v878, %v965
    %v967 = vpop.f32.mrf.mxu0
    %968 = vmatprep.mubr.bf16.mxu0 0
    %969 = vmatmul.mubr.bf16.gmra.mxu0 %v842
    %v970 = vpop.f32.mrf.mxu0
    %v971 = vadd.f32 %v878, %v970
    %v972 = vpop.f32.mrf.mxu0
    %v973 = vpop.f32.mrf.mxu0
    %v974 = vadd.f32 %v878, %v973
    %v975 = vpop.f32.mrf.mxu0
    %976 = vmatprep.mubr.bf16.mxu0 0
    %977 = vmatmul.mubr.bf16.gmra.mxu0 %v843
    %v978 = vpop.f32.mrf.mxu0
    %v979 = vadd.f32 %v878, %v978
    %v980 = vpop.f32.mrf.mxu0
    %v981 = vpop.f32.mrf.mxu0
    %v982 = vadd.f32 %v878, %v981
    %v983 = vpop.f32.mrf.mxu0
    %984 = vmatprep.mubr.bf16.mxu0 0
    %985 = vmatmul.mubr.bf16.gmra.mxu0 %v844
    %v986 = vpop.f32.mrf.mxu0
    %v987 = vadd.f32 %v878, %v986
    %v988 = vpop.f32.mrf.mxu0
    %v989 = vpop.f32.mrf.mxu0
    %v990 = vadd.f32 %v878, %v989
    %v991 = vpop.f32.mrf.mxu0
    %992 = vmatprep.mubr.bf16.mxu0 0
    %993 = vmatmul.mubr.bf16.gmra.mxu0 %v845
    %v994 = vpop.f32.mrf.mxu0
    %v995 = vadd.f32 %v878, %v994
    %v996 = vpop.f32.mrf.mxu0
    %v997 = vpop.f32.mrf.mxu0
    %v998 = vadd.f32 %v878, %v997
    %v999 = vpop.f32.mrf.mxu0
    %1000 = vmatprep.mubr.bf16.mxu0 0
    %1001 = vmatmul.mubr.bf16.gmra.mxu0 %v846
    %v1002 = vpop.f32.mrf.mxu0
    %v1003 = vadd.f32 %v878, %v1002
    %v1004 = vpop.f32.mrf.mxu0
    %v1005 = vpop.f32.mrf.mxu0
    %v1006 = vadd.f32 %v878, %v1005
    %v1007 = vpop.f32.mrf.mxu0
    %1008 = vmatprep.mubr.bf16.mxu0 0
    %1009 = vmatmul.mubr.bf16.gmra.mxu0 %v847
    %v1010 = vpop.f32.mrf.mxu0
    %v1011 = vadd.f32 %v878, %v1010
    %v1012 = vpop.f32.mrf.mxu0
    %v1013 = vpop.f32.mrf.mxu0
    %v1014 = vadd.f32 %v878, %v1013
    %v1015 = vpop.f32.mrf.mxu0
    %1016 = vmatprep.mubr.bf16.mxu0 0
    %1017 = vmatmul.mubr.bf16.gmra.mxu0 %v848
    %v1018 = vpop.f32.mrf.mxu0
    %v1019 = vadd.f32 %v878, %v1018
    %v1020 = vpop.f32.mrf.mxu0
    %v1021 = vpop.f32.mrf.mxu0
    %v1022 = vadd.f32 %v878, %v1021
    %v1023 = vpop.f32.mrf.mxu0
    %1024 = vmatprep.mubr.bf16.mxu0 0
    %1025 = vmatmul.mubr.bf16.gmra.mxu0 %v849
    %v1026 = vpop.f32.mrf.mxu0
    %v1027 = vadd.f32 %v878, %v1026
    %v1028 = vpop.f32.mrf.mxu0
    %v1029 = vpop.f32.mrf.mxu0
    %v1030 = vadd.f32 %v878, %v1029
    %v1031 = vpop.f32.mrf.mxu0
    %1032 = vmatprep.mubr.bf16.mxu0 0
    %1033 = vmatmul.mubr.bf16.gmra.mxu0 %v850
    %v1034 = vpop.f32.mrf.mxu0
    %v1035 = vadd.f32 %v878, %v1034
    %v1036 = vpop.f32.mrf.mxu0
    %v1037 = vpop.f32.mrf.mxu0
    %v1038 = vadd.f32 %v878, %v1037
    %v1039 = vpop.f32.mrf.mxu0
    %1040 = vmatprep.mubr.bf16.mxu0 0
    %1041 = vmatmul.mubr.bf16.gmra.mxu0 %v851
    %v1042 = vpop.f32.mrf.mxu0
    %v1043 = vadd.f32 %v878, %v1042
    %v1044 = vpop.f32.mrf.mxu0
    %v1045 = vpop.f32.mrf.mxu0
    %v1046 = vadd.f32 %v878, %v1045
    %v1047 = vpop.f32.mrf.mxu0
    %1048 = vmatprep.mubr.bf16.mxu0 0
    %1049 = vmatmul.mubr.bf16.gmra.mxu0 %v852
    %v1050 = vpop.f32.mrf.mxu0
    %v1051 = vadd.f32 %v878, %v1050
    %v1052 = vpop.f32.mrf.mxu0
    %v1053 = vpop.f32.mrf.mxu0
    %v1054 = vadd.f32 %v878, %v1053
    %v1055 = vpop.f32.mrf.mxu0
    %1056 = vmatprep.mubr.bf16.mxu0 0
    %1057 = vmatmul.mubr.bf16.gmra.mxu0 %v853
    %v1058 = vpop.f32.mrf.mxu0
    %v1059 = vadd.f32 %v878, %v1058
    %v1060 = vpop.f32.mrf.mxu0
    %v1061 = vpop.f32.mrf.mxu0
    %v1062 = vadd.f32 %v878, %v1061
    %v1063 = vpop.f32.mrf.mxu0
    %1064 = vmatprep.mubr.bf16.mxu0 0
    %1065 = vmatmul.mubr.bf16.gmra.mxu0 %v854
    %v1066 = vpop.f32.mrf.mxu0
    %v1067 = vadd.f32 %v878, %v1066
    %v1068 = vpop.f32.mrf.mxu0
    %v1069 = vpop.f32.mrf.mxu0
    %v1070 = vadd.f32 %v878, %v1069
    %v1071 = vpop.f32.mrf.mxu0
    %1072 = vmatprep.mubr.bf16.mxu0 0
    %1073 = vmatmul.mubr.bf16.gmra.mxu0 %v855
    %v1074 = vpop.f32.mrf.mxu0
    %v1075 = vadd.f32 %v878, %v1074
    %v1076 = vpop.f32.mrf.mxu0
    %v1077 = vpop.f32.mrf.mxu0
    %v1078 = vadd.f32 %v878, %v1077
    %v1079 = vpop.f32.mrf.mxu0
    %1080 = vmatprep.mubr.bf16.mxu0 0
    %1081 = vmatmul.mubr.bf16.gmra.mxu0 %v856
    %v1082 = vpop.f32.mrf.mxu0
    %v1083 = vadd.f32 %v878, %v1082
    %v1084 = vpop.f32.mrf.mxu0
    %v1085 = vpop.f32.mrf.mxu0
    %v1086 = vadd.f32 %v878, %v1085
    %v1087 = vpop.f32.mrf.mxu0
    %1088 = vdwg.mxu0
    %1089 = vst [vmem:[%s7] sm:$0xff] %v963
    %1090 = vst [vmem:[%s7 + $0x8] sm:$0xff] %v966
    %1091 = vst [vmem:[%s7 + $0x10] sm:$0xff] %v971
    %1092 = vst [vmem:[%s7 + $0x18] sm:$0xff] %v974
    %1093 = vst [vmem:[%s7 + $0x20] sm:$0xff] %v979
    %1094 = vst [vmem:[%s7 + $0x28] sm:$0xff] %v982
    %1095 = vst [vmem:[%s7 + $0x30] sm:$0xff] %v987
    %1096 = vst [vmem:[%s7 + $0x38] sm:$0xff] %v990
    %1097 = vst [vmem:[%s7 + $0x40] sm:$0xff] %v995
    %1098 = vst [vmem:[%s7 + $0x48] sm:$0xff] %v998
    %1099 = vst [vmem:[%s7 + $0x50] sm:$0xff] %v1003
    %1100 = vst [vmem:[%s7 + $0x58] sm:$0xff] %v1006
    %1101 = vst [vmem:[%s7 + $0x60] sm:$0xff] %v1011
    %1102 = vst [vmem:[%s7 + $0x68] sm:$0xff] %v1014
    %1103 = vst [vmem:[%s7 + $0x70] sm:$0xff] %v1019
    %1104 = vst [vmem:[%s7 + $0x78] sm:$0xff] %v1022
    %1105 = vst [vmem:[%s7 + $0x80] sm:$0xff] %v1027
    %1106 = vst [vmem:[%s7 + $0x88] sm:$0xff] %v1030
    %1107 = vst [vmem:[%s7 + $0x90] sm:$0xff] %v1035
    %1108 = vst [vmem:[%s7 + $0x98] sm:$0xff] %v1038
    %1109 = vst [vmem:[%s7 + $0xa0] sm:$0xff] %v1043
    %1110 = vst [vmem:[%s7 + $0xa8] sm:$0xff] %v1046
    %1111 = vst [vmem:[%s7 + $0xb0] sm:$0xff] %v1051
    %1112 = vst [vmem:[%s7 + $0xb8] sm:$0xff] %v1054
    %1113 = vst [vmem:[%s7 + $0xc0] sm:$0xff] %v1059
    %1114 = vst [vmem:[%s7 + $0xc8] sm:$0xff] %v1062
    %1115 = vst [vmem:[%s7 + $0xd0] sm:$0xff] %v1067
    %1116 = vst [vmem:[%s7 + $0xd8] sm:$0xff] %v1070
    %1117 = vst [vmem:[%s7 + $0xe0] sm:$0xff] %v1075
    %1118 = vst [vmem:[%s7 + $0xe8] sm:$0xff] %v1078
    %1119 = vst [vmem:[%s7 + $0xf0] sm:$0xff] %v1083
    %1120 = vst [vmem:[%s7 + $0xf8] sm:$0xff] %v1086
    // Predicated region
    $region34: #{forward.1} parent=1 // pred_check
      _
    $region35: #{forward.1} parent=1 // pred_check_branch
      %1122 = sbr.rel (0) target = $region37
    $region36: #{forward.1} parent=1 // pred_region
      _
    $region37: #{forward.1} parent=1 // pred_fallthru
      _
    // Predicated region
    $region38: #{forward.1} parent=1 // pred_check
      _
    $region39: #{forward.1} parent=1 // pred_check_branch
      %1124 = sbr.rel (0) target = $region41
    $region40: #{forward.1} parent=1 // pred_region
      _
    $region41: #{forward.1} parent=1 // pred_fallthru
      _
    %1125 = vsyncpa [#allocation3], 1

</llo_original>
